<compile_context>
chip_gen: v6e
topology: v6e:2x2x1
jax: 0.10.0
libtpu: 0.0.40
codegen_flags: <defaults>
</compile_context>

<pallas_src>
import functools

import jax
import jax.numpy as jnp
import numpy as np
from jax.experimental import pallas as pl
from jax.experimental.pallas import tpu as pltpu

LN_EPS = 1e-5  # PyTorch nn.LayerNorm default


# --------------------------- kernel factory ----------------------------------
def _build_kernel(d_model, d_word, ci_len, hidden, off):
    md = d_model * d_word
    inv_n = 1.0 / float(md)

    def kernel(x2d_ref, ci_ref, m_ref, w1_ref, w2_ref, brow_ref,
               o_ref, y2d_ref, flat_ref):
        x2d = x2d_ref[...]                                   # (d_model, d_word) f32
        m = m_ref[...].astype(jnp.float32)                   # folded Wv^T @ Wo^T

        # Attention with a length-1 key sequence: softmax over one key == 1 and the
        # finite float key_padding_mask is a no-op, so MHA == out_proj(v_proj(x)).
        b_attn = brow_ref[:, off["b_attn"]:off["b_attn"] + d_word]   # (1, d_word)
        y2d_ref[...] = (jnp.dot(x2d, m, preferred_element_type=jnp.float32)
                        + b_attn + x2d)                      # attn + residual

        # Row-major flatten (d_model, d_word) -> (1, md) via VMEM scratch
        # (layout plumbing only; replaces the old kron-expanded matmul).
        for i in range(d_model):
            flat_ref[:, i * d_word:(i + 1) * d_word] = y2d_ref[i:i + 1, :]
        y = flat_ref[...]                                    # (1, md), lane-dense

        # LayerNorm over all d_model*d_word elements (centered two-pass variance).
        mean = jnp.sum(y) * inv_n
        dy = y - mean
        var = jnp.sum(dy * dy) * inv_n
        g1 = brow_ref[:, off["ln1_w"]:off["ln1_w"] + md]
        be1 = brow_ref[:, off["ln1_b"]:off["ln1_b"] + md]
        ln_y = dy * jax.lax.rsqrt(var + LN_EPS) * g1 + be1   # (1, md)

        # Feed-forward: implicit torch.cat((canvas, image, ln_y)) -- W1 is sliced
        # in-kernel at the concat boundary (static slices, zero runtime cost).
        w1_ci = w1_ref[0:ci_len, :].astype(jnp.float32)      # (ci_len, H)
        w1_ln = w1_ref[ci_len:ci_len + md, :].astype(jnp.float32)  # (md, H)
        b1 = brow_ref[:, off["b1"]:off["b1"] + hidden]
        h = (jnp.dot(ci_ref[...], w1_ci, preferred_element_type=jnp.float32)
             + jnp.dot(ln_y, w1_ln, preferred_element_type=jnp.float32)
             + b1)
        h = jnp.maximum(h, 0.0)

        b2 = brow_ref[:, off["b2"]:off["b2"] + md]
        ff = jnp.dot(h, w2_ref[...].astype(jnp.float32),
                     preferred_element_type=jnp.float32) + b2
        ff = jnp.maximum(ff, 0.0)     # reference Sequential ends with a ReLU too

        # Residual + LayerNorm2, lane-dense (1, md) store.
        z = ln_y + ff
        mean2 = jnp.sum(z) * inv_n
        dz = z - mean2
        var2 = jnp.sum(dz * dz) * inv_n
        g2 = brow_ref[:, off["ln2_w"]:off["ln2_w"] + md]
        be2 = brow_ref[:, off["ln2_b"]:off["ln2_b"] + md]
        o_ref[...] = dz * jax.lax.rsqrt(var2 + LN_EPS) * g2 + be2

    return kernel


# --------------------------- wrapper ------------------------------------------
def main_unit_forward(x, image, canvas, word_num, params):
    """Pallas implementation of MainUnit.forward (eval mode).

    x: (1, d_model, d_word) (seq_len=1, batch=d_model, embed=d_word) or (d_model, d_word).
    word_num only feeds the float key_padding_mask, which (being finite) has no
    effect on a softmax over a single key -> folded away.
    """
    del word_num  # finite float mask added to the single softmax logit -> no-op

    x2d = jnp.asarray(x, jnp.float32).reshape(-1, x.shape[-1])   # (d_model, d_word)
    d_model, d_word = x2d.shape
    md = d_model * d_word

    # torch.cat order is (canvas, image, ln_y): canvas first.
    ci_row = jnp.concatenate(
        [jnp.asarray(canvas, jnp.float32).reshape(1, -1),
         jnp.asarray(image, jnp.float32).reshape(1, -1)], axis=1)

    w1, w2, m, brow, off = params["w1"], params["w2"], params["m"], params["brow"], params["off"]
    hidden = int(w2.shape[0])
    ci_len = int(w1.shape[0]) - md

    kernel = _build_kernel(d_model, d_word, ci_len, hidden, off)

    args = (x2d, ci_row, m, w1, w2, brow)
    flops = 2 * (d_model * d_word * d_word      # folded attention matmul
                 + ci_len * hidden              # canvas||image part of W1
                 + md * hidden                  # ln_y part of W1
                 + hidden * md)                 # W2
    bytes_accessed = sum(int(a.size) * a.dtype.itemsize for a in args) + md * 4
    cost = pl.CostEstimate(flops=flops, transcendentals=2,
                           bytes_accessed=bytes_accessed)

    vmem = pl.BlockSpec(memory_space=pltpu.MemorySpace.VMEM)
    out_flat = pl.pallas_call(
        kernel,
        out_shape=jax.ShapeDtypeStruct((1, md), jnp.float32),
        in_specs=[vmem] * len(args),
        out_specs=vmem,
        scratch_shapes=[pltpu.VMEM((d_model, d_word), jnp.float32),  # y = attn + x
                        pltpu.VMEM((1, md), jnp.float32)],           # flattened y
        cost_estimate=cost,
    )(*args)

    return out_flat.reshape(1, d_model, d_word)


# --------------------------- parameter setup ----------------------------------
def _pack_bias_row(named_rows):
    """Pack (1, n) f32 rows into one row; every segment starts at a multiple of
    128 lanes so in-kernel slices are aligned (zero-cost) subviews."""
    offsets, chunks, cur = {}, [], 0
    for name, row in named_rows:
        n = int(row.shape[1])
        pad = (-n) % 128
        offsets[name] = cur
        chunks.append(jnp.pad(row.astype(jnp.float32), ((0, 0), (0, pad))))
        cur += n + pad
    return jnp.concatenate(chunks, axis=1), offsets


def make_params(key, d_model, d_word, image_size, hidden_size):
    """Synthetic parameters, pre-processed once into the fused-kernel layout."""
    md = d_model * d_word
    img_len = image_size * image_size
    canvas_len = (2 * image_size) * (2 * image_size)
    ci_len = canvas_len + img_len

    ks = jax.random.split(key, 8)

    def init(k, shape, scale=0.05):
        return (scale * jax.random.normal(k, shape)).astype(jnp.float32)

    # MultiheadAttention fold (seq_len == 1):
    #   out_row = row @ Wv^T @ Wo^T + (bv @ Wo^T + bo), identically for every row.
    # Only the small (d_word, d_word) folded matrix is kept (no kron expansion).
    wv_t = init(ks[0], (d_word, d_word))    # = Wv^T  (in, out layout)
    bv = init(ks[1], (1, d_word))
    wo_t = init(ks[2], (d_word, d_word))    # = Wo^T
    bo = init(ks[3], (1, d_word))
    m_fold = wv_t @ wo_t                    # (d_word, d_word)
    b_fold = bv @ wo_t + bo                 # (1, d_word)

    # Feed-forward weights, (in, out) layout; W1 rows ordered (canvas | image | ln_y).
    w1_t = init(ks[4], (ci_len + md, hidden_size))
    b1 = init(ks[5], (1, hidden_size))
    w2_t = init(ks[6], (hidden_size, md))
    b2 = init(ks[7], (1, md))

    ln1_w = jnp.ones((1, md), jnp.float32)
    ln1_b = jnp.zeros((1, md), jnp.float32)
    ln2_w = jnp.ones((1, md), jnp.float32)
    ln2_b = jnp.zeros((1, md), jnp.float32)

    brow, off = _pack_bias_row([
        ("b_attn", b_fold), ("ln1_w", ln1_w), ("ln1_b", ln1_b),
        ("b1", b1), ("b2", b2), ("ln2_w", ln2_w), ("ln2_b", ln2_b)])

    return dict(
        m=m_fold.astype(jnp.bfloat16),      # weights in bf16 (halved HBM traffic);
        w1=w1_t.astype(jnp.bfloat16),       # all math stays in f32 in-kernel
        w2=w2_t.astype(jnp.bfloat16),
        brow=brow, off=off)


# --------------------------- host-side reference ------------------------------
def _reference_numpy(x, image, canvas, params, d_model, d_word):
    md = d_model * d_word
    w1 = np.asarray(params["w1"].astype(jnp.float32))
    w2 = np.asarray(params["w2"].astype(jnp.float32))
    m = np.asarray(params["m"].astype(jnp.float32))
    brow = np.asarray(params["brow"])
    off = params["off"]
    hidden = w2.shape[0]
    ci_len = w1.shape[0] - md

    def seg(name, n):
        return brow[:, off[name]:off[name] + n]

    x2d = np.asarray(x, np.float32).reshape(d_model, d_word)
    y = x2d @ m + seg("b_attn", d_word) + x2d
    yf = y.reshape(1, md)
    mu = yf.mean(); var = ((yf - mu) ** 2).mean()
    ln_y = (yf - mu) / np.sqrt(var + LN_EPS) * seg("ln1_w", md) + seg("ln1_b", md)
    ci = np.concatenate([np.asarray(canvas, np.float32).reshape(1, -1),
                         np.asarray(image, np.float32).reshape(1, -1)], axis=1)
    h = np.maximum(ci @ w1[:ci_len] + ln_y @ w1[ci_len:] + seg("b1", hidden), 0.0)
    ff = np.maximum(h @ w2 + seg("b2", md), 0.0)
    z = ln_y + ff
    mu2 = z.mean(); var2 = ((z - mu2) ** 2).mean()
    out = (z - mu2) / np.sqrt(var2 + LN_EPS) * seg("ln2_w", md) + seg("ln2_b", md)
    return out.reshape(1, d_model, d_word)


if __name__ == "__main__":
    # Small shapes consistent with the module (d_word divisible by 4 heads).
    d_model, d_word = 8, 32
    image_size, hidden_size = 4, 32
    word_num = 5

    key = jax.random.PRNGKey(0)
    kx, ki, kc, kp = jax.random.split(key, 4)
    x = jax.random.normal(kx, (1, d_model, d_word), dtype=jnp.float32)
    image = jax.random.normal(ki, (image_size * image_size,), dtype=jnp.float32)
    canvas = jax.random.normal(kc, ((2 * image_size) * (2 * image_size),),
                               dtype=jnp.float32)
    params = make_params(kp, d_model, d_word, image_size, hidden_size)

    out = main_unit_forward(x, image, canvas, word_num, params)
    jax.block_until_ready(out)

    assert out.shape == (1, d_model, d_word)
    assert bool(jnp.all(jnp.isfinite(out)))
    ref = _reference_numpy(x, image, canvas, params, d_model, d_word)
    np.testing.assert_allclose(np.asarray(out), ref, rtol=2e-2, atol=2e-2)
    print("KERNEL_OK")
</pallas_src>

<mosaic_0001>
module attributes {stable_mosaic.version = 11 : i64} {
  func.func @kernel(%arg0: memref<8x32xf32, #tpu.memory_space<vmem>>, %arg1: memref<1x80xf32, #tpu.memory_space<vmem>>, %arg2: memref<32x32xbf16, #tpu.memory_space<vmem>>, %arg3: memref<336x32xbf16, #tpu.memory_space<vmem>>, %arg4: memref<32x256xbf16, #tpu.memory_space<vmem>>, %arg5: memref<1x1536xf32, #tpu.memory_space<vmem>>, %arg6: memref<1x256xf32, #tpu.memory_space<vmem>>, %arg7: memref<8x32xf32, #tpu.memory_space<vmem>>, %arg8: memref<1x256xf32, #tpu.memory_space<vmem>>) attributes {dimension_semantics = [], scalar_prefetch = 0 : i64, scratch_operands = 2 : i64, tpu.core_type = #tpu.core_type<tc>} {
    %c0 = arith.constant 0 : index
    %c0_0 = arith.constant 0 : index
    %0 = vector.load %arg0[%c0, %c0_0] : memref<8x32xf32, #tpu.memory_space<vmem>>, vector<8x32xf32>
    %c0_1 = arith.constant 0 : index
    %c0_2 = arith.constant 0 : index
    %1 = vector.load %arg2[%c0_1, %c0_2] : memref<32x32xbf16, #tpu.memory_space<vmem>>, vector<32x32xbf16>
    %2 = arith.extf %1 : vector<32x32xbf16> to vector<32x32xf32>
    %c0_3 = arith.constant 0 : index
    %c0_4 = arith.constant 0 : index
    %3 = vector.load %arg5[%c0_3, %c0_4] : memref<1x1536xf32, #tpu.memory_space<vmem>>, vector<1x32xf32>
    %cst = arith.constant dense<0.000000e+00> : vector<8x32xf32>
    %4 = tpu.matmul %0, %2, %cst {dimension_numbers = #tpu.dot_dimension_numbers<[1], [0], [0], [1], [0, 0, 1, 1], [], []>} : vector<8x32xf32>, vector<32x32xf32>, vector<8x32xf32> -> vector<8x32xf32>
    %5 = vector.broadcast %3 : vector<1x32xf32> to vector<8x32xf32>
    %6 = arith.addf %4, %5 : vector<8x32xf32>
    %7 = arith.addf %6, %0 : vector<8x32xf32>
    %c0_5 = arith.constant 0 : index
    %c0_6 = arith.constant 0 : index
    %8 = vector.load %arg7[%c0_5, %c0_6] : memref<8x32xf32, #tpu.memory_space<vmem>>, vector<8x32xf32>
    tpu.vector_store %arg7[%c0_5, %c0_6], %7 {strides = array<i32>} : memref<8x32xf32, #tpu.memory_space<vmem>>, vector<8x32xf32>,
    %c0_7 = arith.constant 0 : index
    %c0_8 = arith.constant 0 : index
    %9 = vector.load %arg7[%c0_7, %c0_8] : memref<8x32xf32, #tpu.memory_space<vmem>>, vector<1x32xf32>
    %c0_9 = arith.constant 0 : index
    %c0_10 = arith.constant 0 : index
    %10 = vector.load %arg8[%c0_9, %c0_10] : memref<1x256xf32, #tpu.memory_space<vmem>>, vector<1x32xf32>
    tpu.vector_store %arg8[%c0_9, %c0_10], %9 {strides = array<i32>} : memref<1x256xf32, #tpu.memory_space<vmem>>, vector<1x32xf32>,
    %c1 = arith.constant 1 : index
    %c0_11 = arith.constant 0 : index
    %11 = vector.load %arg7[%c1, %c0_11] : memref<8x32xf32, #tpu.memory_space<vmem>>, vector<1x32xf32>
    %c0_12 = arith.constant 0 : index
    %c32 = arith.constant 32 : index
    %12 = vector.load %arg8[%c0_12, %c32] : memref<1x256xf32, #tpu.memory_space<vmem>>, vector<1x32xf32>
    tpu.vector_store %arg8[%c0_12, %c32], %11 {strides = array<i32>} : memref<1x256xf32, #tpu.memory_space<vmem>>, vector<1x32xf32>,
    %c2 = arith.constant 2 : index
    %c0_13 = arith.constant 0 : index
    %13 = vector.load %arg7[%c2, %c0_13] : memref<8x32xf32, #tpu.memory_space<vmem>>, vector<1x32xf32>
    %c0_14 = arith.constant 0 : index
    %c64 = arith.constant 64 : index
    %14 = vector.load %arg8[%c0_14, %c64] : memref<1x256xf32, #tpu.memory_space<vmem>>, vector<1x32xf32>
    tpu.vector_store %arg8[%c0_14, %c64], %13 {strides = array<i32>} : memref<1x256xf32, #tpu.memory_space<vmem>>, vector<1x32xf32>,
    %c3 = arith.constant 3 : index
    %c0_15 = arith.constant 0 : index
    %15 = vector.load %arg7[%c3, %c0_15] : memref<8x32xf32, #tpu.memory_space<vmem>>, vector<1x32xf32>
    %c0_16 = arith.constant 0 : index
    %c96 = arith.constant 96 : index
    %16 = vector.load %arg8[%c0_16, %c96] : memref<1x256xf32, #tpu.memory_space<vmem>>, vector<1x32xf32>
    tpu.vector_store %arg8[%c0_16, %c96], %15 {strides = array<i32>} : memref<1x256xf32, #tpu.memory_space<vmem>>, vector<1x32xf32>,
    %c4 = arith.constant 4 : index
    %c0_17 = arith.constant 0 : index
    %17 = vector.load %arg7[%c4, %c0_17] : memref<8x32xf32, #tpu.memory_space<vmem>>, vector<1x32xf32>
    %c0_18 = arith.constant 0 : index
    %c128 = arith.constant 128 : index
    %18 = vector.load %arg8[%c0_18, %c128] : memref<1x256xf32, #tpu.memory_space<vmem>>, vector<1x32xf32>
    tpu.vector_store %arg8[%c0_18, %c128], %17 {strides = array<i32>} : memref<1x256xf32, #tpu.memory_space<vmem>>, vector<1x32xf32>,
    %c5 = arith.constant 5 : index
    %c0_19 = arith.constant 0 : index
    %19 = vector.load %arg7[%c5, %c0_19] : memref<8x32xf32, #tpu.memory_space<vmem>>, vector<1x32xf32>
    %c0_20 = arith.constant 0 : index
    %c160 = arith.constant 160 : index
    %20 = vector.load %arg8[%c0_20, %c160] : memref<1x256xf32, #tpu.memory_space<vmem>>, vector<1x32xf32>
    tpu.vector_store %arg8[%c0_20, %c160], %19 {strides = array<i32>} : memref<1x256xf32, #tpu.memory_space<vmem>>, vector<1x32xf32>,
    %c6 = arith.constant 6 : index
    %c0_21 = arith.constant 0 : index
    %21 = vector.load %arg7[%c6, %c0_21] : memref<8x32xf32, #tpu.memory_space<vmem>>, vector<1x32xf32>
    %c0_22 = arith.constant 0 : index
    %c192 = arith.constant 192 : index
    %22 = vector.load %arg8[%c0_22, %c192] : memref<1x256xf32, #tpu.memory_space<vmem>>, vector<1x32xf32>
    tpu.vector_store %arg8[%c0_22, %c192], %21 {strides = array<i32>} : memref<1x256xf32, #tpu.memory_space<vmem>>, vector<1x32xf32>,
    %c7 = arith.constant 7 : index
    %c0_23 = arith.constant 0 : index
    %23 = vector.load %arg7[%c7, %c0_23] : memref<8x32xf32, #tpu.memory_space<vmem>>, vector<1x32xf32>
    %c0_24 = arith.constant 0 : index
    %c224 = arith.constant 224 : index
    %24 = vector.load %arg8[%c0_24, %c224] : memref<1x256xf32, #tpu.memory_space<vmem>>, vector<1x32xf32>
    tpu.vector_store %arg8[%c0_24, %c224], %23 {strides = array<i32>} : memref<1x256xf32, #tpu.memory_space<vmem>>, vector<1x32xf32>,
    %c0_25 = arith.constant 0 : index
    %c0_26 = arith.constant 0 : index
    %25 = vector.load %arg8[%c0_25, %c0_26] : memref<1x256xf32, #tpu.memory_space<vmem>>, vector<1x256xf32>
    %26 = vector.shape_cast %25 : vector<1x256xf32> to vector<1x1x256xf32>
    %cst_27 = arith.constant dense<0.000000e+00> : vector<1xf32>
    %27 = vector.multi_reduction <add>, %26, %cst_27 [1, 2] : vector<1x1x256xf32> to vector<1xf32>
    %28 = vector.shape_cast %27 : vector<1xf32> to vector<1x1x1xf32>
    %29 = vector.extract %28[0, 0, 0] : f32 from vector<1x1x1xf32>
    %cst_28 = arith.constant 3.906250e-03 : f32
    %30 = arith.mulf %29, %cst_28 : f32
    %31 = vector.broadcast %30 : f32 to vector<1x256xf32>
    %32 = arith.subf %25, %31 : vector<1x256xf32>
    %33 = arith.mulf %32, %32 : vector<1x256xf32>
    %34 = vector.shape_cast %33 : vector<1x256xf32> to vector<1x1x256xf32>
    %cst_29 = arith.constant dense<0.000000e+00> : vector<1xf32>
    %35 = vector.multi_reduction <add>, %34, %cst_29 [1, 2] : vector<1x1x256xf32> to vector<1xf32>
    %36 = vector.shape_cast %35 : vector<1xf32> to vector<1x1x1xf32>
    %37 = vector.extract %36[0, 0, 0] : f32 from vector<1x1x1xf32>
    %cst_30 = arith.constant 3.906250e-03 : f32
    %38 = arith.mulf %37, %cst_30 : f32
    %c0_31 = arith.constant 0 : index
    %c128_32 = arith.constant 128 : index
    %39 = vector.load %arg5[%c0_31, %c128_32] : memref<1x1536xf32, #tpu.memory_space<vmem>>, vector<1x256xf32>
    %c0_33 = arith.constant 0 : index
    %c384 = arith.constant 384 : index
    %40 = vector.load %arg5[%c0_33, %c384] : memref<1x1536xf32, #tpu.memory_space<vmem>>, vector<1x256xf32>
    %cst_34 = arith.constant 9.99999974E-6 : f32
    %41 = arith.addf %38, %cst_34 : f32
    %42 = math.rsqrt %41 : f32
    %43 = vector.broadcast %42 : f32 to vector<1x256xf32>
    %44 = arith.mulf %32, %43 : vector<1x256xf32>
    %45 = arith.mulf %44, %39 : vector<1x256xf32>
    %46 = arith.addf %45, %40 : vector<1x256xf32>
    %c0_35 = arith.constant 0 : index
    %c0_36 = arith.constant 0 : index
    %47 = vector.load %arg3[%c0_35, %c0_36] : memref<336x32xbf16, #tpu.memory_space<vmem>>, vector<80x32xbf16>
    %48 = arith.extf %47 : vector<80x32xbf16> to vector<80x32xf32>
    %c80 = arith.constant 80 : index
    %c0_37 = arith.constant 0 : index
    %49 = vector.load %arg3[%c80, %c0_37] : memref<336x32xbf16, #tpu.memory_space<vmem>>, vector<256x32xbf16>
    %50 = arith.extf %49 : vector<256x32xbf16> to vector<256x32xf32>
    %c0_38 = arith.constant 0 : index
    %c640 = arith.constant 640 : index
    %51 = vector.load %arg5[%c0_38, %c640] : memref<1x1536xf32, #tpu.memory_space<vmem>>, vector<1x32xf32>
    %c0_39 = arith.constant 0 : index
    %c0_40 = arith.constant 0 : index
    %52 = vector.load %arg1[%c0_39, %c0_40] : memref<1x80xf32, #tpu.memory_space<vmem>>, vector<1x80xf32>
    %cst_41 = arith.constant dense<0.000000e+00> : vector<1x32xf32>
    %53 = tpu.matmul %52, %48, %cst_41 {dimension_numbers = #tpu.dot_dimension_numbers<[1], [0], [0], [1], [0, 0, 1, 1], [], []>} : vector<1x80xf32>, vector<80x32xf32>, vector<1x32xf32> -> vector<1x32xf32>
    %cst_42 = arith.constant dense<0.000000e+00> : vector<1x32xf32>
    %54 = tpu.matmul %46, %50, %cst_42 {dimension_numbers = #tpu.dot_dimension_numbers<[1], [0], [0], [1], [0, 0, 1, 1], [], []>} : vector<1x256xf32>, vector<256x32xf32>, vector<1x32xf32> -> vector<1x32xf32>
    %55 = arith.addf %53, %54 : vector<1x32xf32>
    %56 = arith.addf %55, %51 : vector<1x32xf32>
    %cst_43 = arith.constant 0.000000e+00 : f32
    %57 = vector.broadcast %cst_43 : f32 to vector<1x32xf32>
    %58 = arith.maximumf %56, %57 : vector<1x32xf32>
    %c0_44 = arith.constant 0 : index
    %c768 = arith.constant 768 : index
    %59 = vector.load %arg5[%c0_44, %c768] : memref<1x1536xf32, #tpu.memory_space<vmem>>, vector<1x256xf32>
    %c0_45 = arith.constant 0 : index
    %c0_46 = arith.constant 0 : index
    %60 = vector.load %arg4[%c0_45, %c0_46] : memref<32x256xbf16, #tpu.memory_space<vmem>>, vector<32x256xbf16>
    %61 = arith.extf %60 : vector<32x256xbf16> to vector<32x256xf32>
    %cst_47 = arith.constant dense<0.000000e+00> : vector<1x256xf32>
    %62 = tpu.matmul %58, %61, %cst_47 {dimension_numbers = #tpu.dot_dimension_numbers<[1], [0], [0], [1], [0, 0, 1, 1], [], []>} : vector<1x32xf32>, vector<32x256xf32>, vector<1x256xf32> -> vector<1x256xf32>
    %63 = arith.addf %62, %59 : vector<1x256xf32>
    %cst_48 = arith.constant 0.000000e+00 : f32
    %64 = vector.broadcast %cst_48 : f32 to vector<1x256xf32>
    %65 = arith.maximumf %63, %64 : vector<1x256xf32>
    %66 = arith.addf %46, %65 : vector<1x256xf32>
    %67 = vector.shape_cast %66 : vector<1x256xf32> to vector<1x1x256xf32>
    %cst_49 = arith.constant dense<0.000000e+00> : vector<1xf32>
    %68 = vector.multi_reduction <add>, %67, %cst_49 [1, 2] : vector<1x1x256xf32> to vector<1xf32>
    %69 = vector.shape_cast %68 : vector<1xf32> to vector<1x1x1xf32>
    %70 = vector.extract %69[0, 0, 0] : f32 from vector<1x1x1xf32>
    %cst_50 = arith.constant 3.906250e-03 : f32
    %71 = arith.mulf %70, %cst_50 : f32
    %72 = vector.broadcast %71 : f32 to vector<1x256xf32>
    %73 = arith.subf %66, %72 : vector<1x256xf32>
    %74 = arith.mulf %73, %73 : vector<1x256xf32>
    %75 = vector.shape_cast %74 : vector<1x256xf32> to vector<1x1x256xf32>
    %cst_51 = arith.constant dense<0.000000e+00> : vector<1xf32>
    %76 = vector.multi_reduction <add>, %75, %cst_51 [1, 2] : vector<1x1x256xf32> to vector<1xf32>
    %77 = vector.shape_cast %76 : vector<1xf32> to vector<1x1x1xf32>
    %78 = vector.extract %77[0, 0, 0] : f32 from vector<1x1x1xf32>
    %cst_52 = arith.constant 3.906250e-03 : f32
    %79 = arith.mulf %78, %cst_52 : f32
    %c0_53 = arith.constant 0 : index
    %c1024 = arith.constant 1024 : index
    %80 = vector.load %arg5[%c0_53, %c1024] : memref<1x1536xf32, #tpu.memory_space<vmem>>, vector<1x256xf32>
    %c0_54 = arith.constant 0 : index
    %c1280 = arith.constant 1280 : index
    %81 = vector.load %arg5[%c0_54, %c1280] : memref<1x1536xf32, #tpu.memory_space<vmem>>, vector<1x256xf32>
    %cst_55 = arith.constant 9.99999974E-6 : f32
    %82 = arith.addf %79, %cst_55 : f32
    %83 = math.rsqrt %82 : f32
    %84 = vector.broadcast %83 : f32 to vector<1x256xf32>
    %85 = arith.mulf %73, %84 : vector<1x256xf32>
    %86 = arith.mulf %85, %80 : vector<1x256xf32>
    %87 = arith.addf %86, %81 : vector<1x256xf32>
    %c0_56 = arith.constant 0 : index
    %c0_57 = arith.constant 0 : index
    %88 = vector.load %arg6[%c0_56, %c0_57] : memref<1x256xf32, #tpu.memory_space<vmem>>, vector<1x256xf32>
    tpu.vector_store %arg6[%c0_56, %c0_57], %87 {strides = array<i32>} : memref<1x256xf32, #tpu.memory_space<vmem>>, vector<1x256xf32>,
    return
  }
}

</mosaic_0001>

<llo_original>
// kernel: tpu_custom_call.1
$region0: #{tpu_custom_call.1}
  #allocation0 [shape = 'u32[]', space=smem, size = 0x4, offset = 0x4, fixed_abs, tag = 'smem constant byte address 0x4 - core index']
  #allocation1 [shape = 'u32[144,128]{1,0:T(1,128)}', space=vmem, size = 0x12000, scoped, tag = 'internal scratch']
  #allocation2 [shape = 'f32[8,32]{1,0:T(8,128)}', space=vmem, size = 0x1000, scoped, tag = 'scratch operand']
  #allocation3 [shape = 'f32[1,256]{1,0:T(1,128)}', space=vmem, size = 0x400, scoped, tag = 'scratch operand']
  %s0 = inlined_call_operand.vmem [shape: f32[8,32], index: 0, kind: input, shape index: {}]
  %s1 = inlined_call_operand.vmem [shape: f32[1,80], index: 1, kind: input, shape index: {}]
  %s2 = inlined_call_operand.vmem [shape: bf16[32,32], index: 2, kind: input, shape index: {}]
  %s3 = inlined_call_operand.vmem [shape: bf16[336,32], index: 3, kind: input, shape index: {}]
  %s4 = inlined_call_operand.vmem [shape: bf16[32,256], index: 4, kind: input, shape index: {}]
  %s5 = inlined_call_operand.vmem [shape: f32[1,1536], index: 5, kind: input, shape index: {}]
  %s6 = inlined_call_operand.hbm [shape: f32[1,256], index: 6, kind: output, shape index: {}]
  %s7 = sld [smem:[#allocation0]]
  $region34: #{tpu_custom_call.1} parent=0
    _
  %s9 = ssub.s32 1, %s7
  %s10 = scalar_select 0, %s9, %s7
  $region1: #{tpu_custom_call.1} parent=0
    #allocation4 [shape = 'u8[1024]{0}', space=vmem, size = 0x400, scoped, tag = 'output window, operand 0, single buffered']
    #allocation5 [shape = 's32[1]{0}', space=sflag, size = 0x4, scoped, tag = 'scoped memory for tpu_custom_call.1']
    %11 = vsyncpa [#allocation5], 0
    // Predicated region
    $region2: #{tpu_custom_call.1} parent=1 // pred_check
      _
    $region3: #{tpu_custom_call.1} parent=1 // pred_check_branch
      %13 = sbr.rel (0) target = $region5
    $region4: #{tpu_custom_call.1} parent=1 // pred_region
      _
    $region5: #{tpu_custom_call.1} parent=1 // pred_fallthru
      _
    // Predicated region
    $region6: #{tpu_custom_call.1} parent=1 // pred_check
      _
    $region7: #{tpu_custom_call.1} parent=1 // pred_check_branch
      %15 = sbr.rel (0) target = $region9
    $region8: #{tpu_custom_call.1} parent=1 // pred_region
      _
    $region9: #{tpu_custom_call.1} parent=1 // pred_fallthru
      _
    // Predicated region
    $region10: #{tpu_custom_call.1} parent=1 // pred_check
      _
    $region11: #{tpu_custom_call.1} parent=1 // pred_check_branch
      %17 = sbr.rel (0) target = $region13
    $region12: #{tpu_custom_call.1} parent=1 // pred_region
      _
    $region13: #{tpu_custom_call.1} parent=1 // pred_fallthru
      _
    // Predicated region
    $region14: #{tpu_custom_call.1} parent=1 // pred_check
      _
    $region15: #{tpu_custom_call.1} parent=1 // pred_check_branch
      %19 = sbr.rel (0) target = $region17
    $region16: #{tpu_custom_call.1} parent=1 // pred_region
      _
    $region17: #{tpu_custom_call.1} parent=1 // pred_fallthru
      _
    // Predicated region
    $region18: #{tpu_custom_call.1} parent=1 // pred_check
      _
    $region19: #{tpu_custom_call.1} parent=1 // pred_check_branch
      %21 = sbr.rel (0) target = $region21
    $region20: #{tpu_custom_call.1} parent=1 // pred_region
      _
    $region21: #{tpu_custom_call.1} parent=1 // pred_fallthru
      _
    // Predicated region
    $region22: #{tpu_custom_call.1} parent=1 // pred_check
      _
    $region23: #{tpu_custom_call.1} parent=1 // pred_check_branch
      %23 = sbr.rel (0) target = $region25
    $region24: #{tpu_custom_call.1} parent=1 // pred_region
      _
    $region25: #{tpu_custom_call.1} parent=1 // pred_fallthru
      _
    %v24 = vld [vmem:[%s0] sm:$0xff]
    %v25 = vld [vmem:[%s2] sm:$0xf]
    %v26 = vld [vmem:[%s2 + $0x4] sm:$0xf]
    %v27 = vld [vmem:[%s2 + $0x8] sm:$0xf]
    %v28 = vld [vmem:[%s2 + $0xc] sm:$0xf]
    %v29 = vunpack.c.l.bf16 %v25
    %v30 = vunpack.c.l.bf16 %v26
    %v31 = vunpack.c.l.bf16 %v27
    %v32 = vunpack.c.l.bf16 %v28
    %v33 = vld [vmem:[%s5] sm:$0x1]
    %v35 = vlaneseq
    %v36 = vshrl.u32 %v35, 7
    %v37 = vsub.s32 0, %v36
    %v38 = vrot.slane %v33, %v37
    %vm40 = vcmask 261120
    %v42 = vsel %vm40, %v24, 0
    %44 = vmatprep.subr.mxu0 0.0
    %45 = vmatpush1.msra.mxu0 0.0
    %46 = vmatprep.subr.mxu0 0.0
    %47 = vmatpush1.msra.mxu0 0.0
    %48 = vmatprep.subr.mxu0 0.0
    %49 = vmatpush1.msra.mxu0 0.0
    %50 = vmatprep.subr.mxu0 0.0
    %51 = vmatpush1.msra.mxu0 0.0
    %52 = vmatprep.subr.mxu0 0.0
    %53 = vmatpush1.msra.mxu0 0.0
    %54 = vmatprep.subr.mxu0 0.0
    %55 = vmatpush1.msra.mxu0 0.0
    %56 = vmatprep.subr.mxu0 0.0
    %57 = vmatpush1.msra.mxu0 0.0
    %58 = vmatprep.subr.mxu0 0.0
    %59 = vmatpush1.msra.mxu0 0.0
    %60 = vmatprep.subr.mxu0 0.0
    %61 = vmatpush1.msra.mxu0 0.0
    %62 = vmatprep.subr.mxu0 0.0
    %63 = vmatpush1.msra.mxu0 0.0
    %64 = vmatprep.subr.mxu0 0.0
    %65 = vmatpush1.msra.mxu0 0.0
    %66 = vmatprep.subr.mxu0 0.0
    %67 = vmatpush1.msra.mxu0 0.0
    %68 = vmatprep.subr.mxu0 0.0
    %69 = vmatpush1.msra.mxu0 %v32
    %70 = vmatprep.subr.mxu0 0.0
    %71 = vmatpush1.msra.mxu0 %v31
    %72 = vmatprep.subr.mxu0 0.0
    %73 = vmatpush1.msra.mxu0 %v30
    %74 = vmatprep.subr.mxu0 0.0
    %75 = vmatpush1.msra.mxu0 %v29
    %76 = vmatprep.subr.mxu0 0.0
    %77 = vmatpush2.msra.mxu0 0.0
    %78 = vmatprep.subr.mxu0 0.0
    %79 = vmatpush2.msra.mxu0 0.0
    %80 = vmatprep.subr.mxu0 0.0
    %81 = vmatpush2.msra.mxu0 0.0
    %82 = vmatprep.subr.mxu0 0.0
    %83 = vmatpush2.msra.mxu0 0.0
    %84 = vmatprep.subr.mxu0 0.0
    %85 = vmatpush2.msra.mxu0 0.0
    %86 = vmatprep.subr.mxu0 0.0
    %87 = vmatpush2.msra.mxu0 0.0
    %88 = vmatprep.subr.mxu0 0.0
    %89 = vmatpush2.msra.mxu0 0.0
    %90 = vmatprep.subr.mxu0 0.0
    %91 = vmatpush2.msra.mxu0 0.0
    %92 = vmatprep.subr.mxu0 0.0
    %93 = vmatpush2.msra.mxu0 0.0
    %94 = vmatprep.subr.mxu0 0.0
    %95 = vmatpush2.msra.mxu0 0.0
    %96 = vmatprep.subr.mxu0 0.0
    %97 = vmatpush2.msra.mxu0 0.0
    %98 = vmatprep.subr.mxu0 0.0
    %99 = vmatpush2.msra.mxu0 0.0
    %100 = vmatprep.subr.mxu0 0.0
    %101 = vmatpush2.msra.mxu0 0.0
    %102 = vmatprep.subr.mxu0 0.0
    %103 = vmatpush2.msra.mxu0 0.0
    %104 = vmatprep.subr.mxu0 0.0
    %105 = vmatpush2.msra.mxu0 0.0
    %106 = vmatprep.subr.mxu0 0.0
    %107 = vmatpush2.msra.mxu0 0.0
    %108 = vmatprep.mubr.f32.mxu0 0.0
    %109 = vmatmul.mubr.f32.gmra.mxu0 %v42
    %v110 = vpop.f32.mrf.mxu0
    %v111 = vadd.f32 %v38, %v110
    %v112 = vpop.f32.mrf.mxu0
    %113 = vdwg.mxu0
    %v114 = vadd.f32 %v111, %v24
    %115 = vst.msk [vmem:[#allocation2] sm:$0xff] %vm40, %v114
    %v116 = vld [vmem:[#allocation2] sm:$0x1]
    %v117 = vlaneseq
    %vm118 = vcmp.ge.s32.totalorder %v117, 0
    %vm119 = vcmp.lt.s32.totalorder %v117, 32
    %vm120 = vmand %vm118, %vm119
    %121 = vst.msk [vmem:[#allocation3] sm:$0x1] %vm120, %v116
    %v122 = vld [vmem:[#allocation2 + $0x1] sm:$0x1]
    %v125 = vunpack.c.l.s4 1966171168
    %v126 = vunpack.c.0.s8 %v125
    %v127 = vlaneseq
    %v128 = vshrl.u32 %v127, 7
    %v129 = vsub.s32 %v126, %v128
    %v130 = vrot.slane %v122, %v129
    %v132 = vunpack.c.l.s4 1966171168
    %v133 = vunpack.c.0.s8 %v132
    %v134 = vlaneseq
    %v135 = vshrl.u32 %v134, 7
    %v136 = vsub.s32 %v133, %v135
    %v137 = vrot.slane %v130, %v136
    %138 = vrot.lane.b32.xlu0 %v137, 32
    %v139 = vpop.permute.xlu0 %138
    %vm141 = vcmp.ge.s32.totalorder %v117, 32
    %vm142 = vcmp.lt.s32.totalorder %v117, 64
    %vm143 = vmand %vm141, %vm142
    %144 = vst.msk [vmem:[#allocation3] sm:$0x1] %vm143, %v139
    %v145 = vld [vmem:[#allocation2 + $0x2] sm:$0x1]
    %v148 = vunpack.c.l.s4 1966171168
    %v149 = vunpack.c.0.s8 %v148
    %v150 = vlaneseq
    %v151 = vshrl.u32 %v150, 7
    %v152 = vsub.s32 %v149, %v151
    %v153 = vrot.slane %v145, %v152
    %v155 = vunpack.c.l.s4 1966171168
    %v156 = vunpack.c.0.s8 %v155
    %v157 = vlaneseq
    %v158 = vshrl.u32 %v157, 7
    %v159 = vsub.s32 %v156, %v158
    %v160 = vrot.slane %v153, %v159
    %161 = vrot.lane.b32.xlu0 %v160, 64
    %v162 = vpop.permute.xlu0 %161
    %vm164 = vcmp.ge.s32.totalorder %v117, 64
    %vm165 = vcmp.lt.s32.totalorder %v117, 96
    %vm166 = vmand %vm164, %vm165
    %167 = vst.msk [vmem:[#allocation3] sm:$0x1] %vm166, %v162
    %v168 = vld [vmem:[#allocation2 + $0x3] sm:$0x1]
    %v171 = vunpack.c.l.s4 1966171168
    %v172 = vunpack.c.0.s8 %v171
    %v173 = vlaneseq
    %v174 = vshrl.u32 %v173, 7
    %v175 = vsub.s32 %v172, %v174
    %v176 = vrot.slane %v168, %v175
    %v178 = vunpack.c.l.s4 1966171168
    %v179 = vunpack.c.0.s8 %v178
    %v180 = vlaneseq
    %v181 = vshrl.u32 %v180, 7
    %v182 = vsub.s32 %v179, %v181
    %v183 = vrot.slane %v176, %v182
    %184 = vrot.lane.b32.xlu0 %v183, 96
    %v185 = vpop.permute.xlu0 %184
    %vm187 = vcmp.ge.s32.totalorder %v117, 96
    %vm188 = vcmp.lt.s32.totalorder %v117, 128
    %vm189 = vmand %vm187, %vm188
    %190 = vst.msk [vmem:[#allocation3] sm:$0x1] %vm189, %v185
    %v191 = vld [vmem:[#allocation2 + $0x4] sm:$0x1]
    %192 = vst.msk [vmem:[#allocation3 + $0x1] sm:$0x1] %vm120, %v191
    %v193 = vld [vmem:[#allocation2 + $0x5] sm:$0x1]
    %v196 = vunpack.c.l.s4 1966171168
    %v197 = vunpack.c.0.s8 %v196
    %v198 = vlaneseq
    %v199 = vshrl.u32 %v198, 7
    %v200 = vsub.s32 %v197, %v199
    %v201 = vrot.slane %v193, %v200
    %v203 = vunpack.c.l.s4 1966171168
    %v204 = vunpack.c.0.s8 %v203
    %v205 = vlaneseq
    %v206 = vshrl.u32 %v205, 7
    %v207 = vsub.s32 %v204, %v206
    %v208 = vrot.slane %v201, %v207
    %209 = vrot.lane.b32.xlu0 %v208, 32
    %v210 = vpop.permute.xlu0 %209
    %212 = vst.msk [vmem:[#allocation3 + $0x1] sm:$0x1] %vm143, %v210
    %v213 = vld [vmem:[#allocation2 + $0x6] sm:$0x1]
    %v216 = vunpack.c.l.s4 1966171168
    %v217 = vunpack.c.0.s8 %v216
    %v218 = vlaneseq
    %v219 = vshrl.u32 %v218, 7
    %v220 = vsub.s32 %v217, %v219
    %v221 = vrot.slane %v213, %v220
    %v223 = vunpack.c.l.s4 1966171168
    %v224 = vunpack.c.0.s8 %v223
    %v225 = vlaneseq
    %v226 = vshrl.u32 %v225, 7
    %v227 = vsub.s32 %v224, %v226
    %v228 = vrot.slane %v221, %v227
    %229 = vrot.lane.b32.xlu0 %v228, 64
    %v230 = vpop.permute.xlu0 %229
    %232 = vst.msk [vmem:[#allocation3 + $0x1] sm:$0x1] %vm166, %v230
    %v233 = vld [vmem:[#allocation2 + $0x7] sm:$0x1]
    %v236 = vunpack.c.l.s4 1966171168
    %v237 = vunpack.c.0.s8 %v236
    %v238 = vlaneseq
    %v239 = vshrl.u32 %v238, 7
    %v240 = vsub.s32 %v237, %v239
    %v241 = vrot.slane %v233, %v240
    %v243 = vunpack.c.l.s4 1966171168
    %v244 = vunpack.c.0.s8 %v243
    %v245 = vlaneseq
    %v246 = vshrl.u32 %v245, 7
    %v247 = vsub.s32 %v244, %v246
    %v248 = vrot.slane %v241, %v247
    %249 = vrot.lane.b32.xlu0 %v248, 96
    %v250 = vpop.permute.xlu0 %249
    %252 = vst.msk [vmem:[#allocation3 + $0x1] sm:$0x1] %vm189, %v250
    %v253 = vld [vmem:[#allocation3] sm:$0x3]
    %v255 = vlaneseq
    %v256 = vshrl.u32 %v255, 7
    %v257 = vsub.s32 0, %v256
    %v258 = vrot.slane %v253, %v257
    %v259 = vlaneseq
    %v260 = vshrl.u32 %v259, 7
    %v261 = vsub.s32 1, %v260
    %v262 = vrot.slane %v253, %v261
    %vm265 = vcmask 1040384
    %v266 = vsel %vm265, %v258, 0.0
    %v267 = vsel %vm265, %v262, 0.0
    %v268 = vadd.f32 %v266, %v267
    %269 = vadd.xlane.f32.xlu0 %v268
    %v270 = vpop.xlane.xlu0 %269
    %v271 = vrot.slane %v270, 4
    %v272 = vadd.f32 %v270, %v271
    %v273 = vrot.slane %v272, 2
    %v274 = vadd.f32 %v272, %v273
    %v275 = vrot.slane %v274, 1
    %v276 = vadd.f32 %v274, %v275
    %s277 = vtos %v276
    %s278 = smul.f32 %s277, 0.00390625
    %v279 = vstv %s278
    %v280 = vsub.f32 %v253, %v279
    %v281 = vmul.f32 %v280, %v280
    %v283 = vlaneseq
    %v284 = vshrl.u32 %v283, 7
    %v285 = vsub.s32 0, %v284
    %v286 = vrot.slane %v281, %v285
    %v287 = vlaneseq
    %v288 = vshrl.u32 %v287, 7
    %v289 = vsub.s32 1, %v288
    %v290 = vrot.slane %v281, %v289
    %v293 = vsel %vm265, %v286, 0.0
    %v294 = vsel %vm265, %v290, 0.0
    %v295 = vadd.f32 %v293, %v294
    %296 = vadd.xlane.f32.xlu0 %v295
    %v297 = vpop.xlane.xlu0 %296
    %v298 = vrot.slane %v297, 4
    %v299 = vadd.f32 %v297, %v298
    %v300 = vrot.slane %v299, 2
    %v301 = vadd.f32 %v299, %v300
    %v302 = vrot.slane %v301, 1
    %v303 = vadd.f32 %v301, %v302
    %s304 = vtos %v303
    %s305 = smul.f32 %s304, 0.00390625
    %v306 = vld [vmem:[%s5 + $0x1] sm:$0x3]
    %v307 = vld [vmem:[%s5 + $0x3] sm:$0x3]
    %s308 = sadd.f32 %s305, 1e-05
    %v309 = vstv %s308
    %v310 = vrsqrt.pop %v309
    %s311 = vtos %v310
    %v312 = vstv %s311
    %v313 = vmul.f32 %v280, %v312
    %v314 = vmul.f32 %v313, %v306
    %v315 = vadd.f32 %v314, %v307
    %v316 = vld [vmem:[%s3] sm:$0xf]
    %v317 = vld [vmem:[%s3 + $0x4] sm:$0xf]
    %v318 = vld [vmem:[%s3 + $0x8] sm:$0xf]
    %v319 = vld [vmem:[%s3 + $0xc] sm:$0xf]
    %v320 = vld [vmem:[%s3 + $0x10] sm:$0xf]
    %v321 = vld [vmem:[%s3 + $0x14] sm:$0xf]
    %v322 = vld [vmem:[%s3 + $0x18] sm:$0xf]
    %v323 = vld [vmem:[%s3 + $0x1c] sm:$0xf]
    %v324 = vld [vmem:[%s3 + $0x20] sm:$0xf]
    %v325 = vld [vmem:[%s3 + $0x24] sm:$0xf]
    %v326 = vunpack.c.l.bf16 %v316
    %v327 = vunpack.c.l.bf16 %v317
    %v328 = vunpack.c.l.bf16 %v318
    %v329 = vunpack.c.l.bf16 %v319
    %v330 = vunpack.c.l.bf16 %v320
    %v331 = vunpack.c.l.bf16 %v321
    %v332 = vunpack.c.l.bf16 %v322
    %v333 = vunpack.c.l.bf16 %v323
    %v334 = vunpack.c.l.bf16 %v324
    %v335 = vunpack.c.l.bf16 %v325
    %v336 = vld [vmem:[%s3 + $0x28] sm:$0xf]
    %v337 = vld [vmem:[%s3 + $0x2c] sm:$0xf]
    %v338 = vld [vmem:[%s3 + $0x30] sm:$0xf]
    %v339 = vld [vmem:[%s3 + $0x34] sm:$0xf]
    %v340 = vld [vmem:[%s3 + $0x38] sm:$0xf]
    %v341 = vld [vmem:[%s3 + $0x3c] sm:$0xf]
    %v342 = vld [vmem:[%s3 + $0x40] sm:$0xf]
    %v343 = vld [vmem:[%s3 + $0x44] sm:$0xf]
    %v344 = vld [vmem:[%s3 + $0x48] sm:$0xf]
    %v345 = vld [vmem:[%s3 + $0x4c] sm:$0xf]
    %v346 = vld [vmem:[%s3 + $0x50] sm:$0xf]
    %v347 = vld [vmem:[%s3 + $0x54] sm:$0xf]
    %v348 = vld [vmem:[%s3 + $0x58] sm:$0xf]
    %v349 = vld [vmem:[%s3 + $0x5c] sm:$0xf]
    %v350 = vld [vmem:[%s3 + $0x60] sm:$0xf]
    %v351 = vld [vmem:[%s3 + $0x64] sm:$0xf]
    %v352 = vld [vmem:[%s3 + $0x68] sm:$0xf]
    %v353 = vld [vmem:[%s3 + $0x6c] sm:$0xf]
    %v354 = vld [vmem:[%s3 + $0x70] sm:$0xf]
    %v355 = vld [vmem:[%s3 + $0x74] sm:$0xf]
    %v356 = vld [vmem:[%s3 + $0x78] sm:$0xf]
    %v357 = vld [vmem:[%s3 + $0x7c] sm:$0xf]
    %v358 = vld [vmem:[%s3 + $0x80] sm:$0xf]
    %v359 = vld [vmem:[%s3 + $0x84] sm:$0xf]
    %v360 = vld [vmem:[%s3 + $0x88] sm:$0xf]
    %v361 = vld [vmem:[%s3 + $0x8c] sm:$0xf]
    %v362 = vld [vmem:[%s3 + $0x90] sm:$0xf]
    %v363 = vld [vmem:[%s3 + $0x94] sm:$0xf]
    %v364 = vld [vmem:[%s3 + $0x98] sm:$0xf]
    %v365 = vld [vmem:[%s3 + $0x9c] sm:$0xf]
    %v366 = vld [vmem:[%s3 + $0xa0] sm:$0xf]
    %v367 = vld [vmem:[%s3 + $0xa4] sm:$0xf]
    %v368 = vunpack.c.l.bf16 %v336
    %v369 = vunpack.c.l.bf16 %v337
    %v370 = vunpack.c.l.bf16 %v338
    %v371 = vunpack.c.l.bf16 %v339
    %v372 = vunpack.c.l.bf16 %v340
    %v373 = vunpack.c.l.bf16 %v341
    %v374 = vunpack.c.l.bf16 %v342
    %v375 = vunpack.c.l.bf16 %v343
    %v376 = vunpack.c.l.bf16 %v344
    %v377 = vunpack.c.l.bf16 %v345
    %v378 = vunpack.c.l.bf16 %v346
    %v379 = vunpack.c.l.bf16 %v347
    %v380 = vunpack.c.l.bf16 %v348
    %v381 = vunpack.c.l.bf16 %v349
    %v382 = vunpack.c.l.bf16 %v350
    %v383 = vunpack.c.l.bf16 %v351
    %v384 = vunpack.c.l.bf16 %v352
    %v385 = vunpack.c.l.bf16 %v353
    %v386 = vunpack.c.l.bf16 %v354
    %v387 = vunpack.c.l.bf16 %v355
    %v388 = vunpack.c.l.bf16 %v356
    %v389 = vunpack.c.l.bf16 %v357
    %v390 = vunpack.c.l.bf16 %v358
    %v391 = vunpack.c.l.bf16 %v359
    %v392 = vunpack.c.l.bf16 %v360
    %v393 = vunpack.c.l.bf16 %v361
    %v394 = vunpack.c.l.bf16 %v362
    %v395 = vunpack.c.l.bf16 %v363
    %v396 = vunpack.c.l.bf16 %v364
    %v397 = vunpack.c.l.bf16 %v365
    %v398 = vunpack.c.l.bf16 %v366
    %v399 = vunpack.c.l.bf16 %v367
    %v400 = vld [vmem:[%s5 + $0x5] sm:$0x1]
    %v401 = vld [vmem:[%s1] sm:$0x1]
    %v403 = vlaneseq
    %v404 = vshrl.u32 %v403, 7
    %v405 = vsub.s32 0, %v404
    %v406 = vrot.slane %v315, %v405
    %v407 = vlaneseq
    %v408 = vshrl.u32 %v407, 7
    %v409 = vsub.s32 1, %v408
    %v410 = vrot.slane %v315, %v409
    %413 = vmatprep.subr.mxu0 0.0
    %414 = vmatpush1.msra.mxu0 %v383
    %415 = vmatprep.subr.mxu0 0.0
    %416 = vmatpush1.msra.mxu0 %v382
    %417 = vmatprep.subr.mxu0 0.0
    %418 = vmatpush1.msra.mxu0 %v381
    %419 = vmatprep.subr.mxu0 0.0
    %420 = vmatpush1.msra.mxu0 %v380
    %421 = vmatprep.subr.mxu0 0.0
    %422 = vmatpush1.msra.mxu0 %v379
    %423 = vmatprep.subr.mxu0 0.0
    %424 = vmatpush1.msra.mxu0 %v378
    %425 = vmatprep.subr.mxu0 0.0
    %426 = vmatpush1.msra.mxu0 %v377
    %427 = vmatprep.subr.mxu0 0.0
    %428 = vmatpush1.msra.mxu0 %v376
    %429 = vmatprep.subr.mxu0 0.0
    %430 = vmatpush1.msra.mxu0 %v375
    %431 = vmatprep.subr.mxu0 0.0
    %432 = vmatpush1.msra.mxu0 %v374
    %433 = vmatprep.subr.mxu0 0.0
    %434 = vmatpush1.msra.mxu0 %v373
    %435 = vmatprep.subr.mxu0 0.0
    %436 = vmatpush1.msra.mxu0 %v372
    %437 = vmatprep.subr.mxu0 0.0
    %438 = vmatpush1.msra.mxu0 %v371
    %439 = vmatprep.subr.mxu0 0.0
    %440 = vmatpush1.msra.mxu0 %v370
    %441 = vmatprep.subr.mxu0 0.0
    %442 = vmatpush1.msra.mxu0 %v369
    %443 = vmatprep.subr.mxu0 0.0
    %444 = vmatpush1.msra.mxu0 %v368
    %445 = vmatprep.subr.mxu0 0.0
    %446 = vmatpush2.msra.mxu0 %v399
    %447 = vmatprep.subr.mxu0 0.0
    %448 = vmatpush2.msra.mxu0 %v398
    %449 = vmatprep.subr.mxu0 0.0
    %450 = vmatpush2.msra.mxu0 %v397
    %451 = vmatprep.subr.mxu0 0.0
    %452 = vmatpush2.msra.mxu0 %v396
    %453 = vmatprep.subr.mxu0 0.0
    %454 = vmatpush2.msra.mxu0 %v395
    %455 = vmatprep.subr.mxu0 0.0
    %456 = vmatpush2.msra.mxu0 %v394
    %457 = vmatprep.subr.mxu0 0.0
    %458 = vmatpush2.msra.mxu0 %v393
    %459 = vmatprep.subr.mxu0 0.0
    %460 = vmatpush2.msra.mxu0 %v392
    %461 = vmatprep.subr.mxu0 0.0
    %462 = vmatpush2.msra.mxu0 %v391
    %463 = vmatprep.subr.mxu0 0.0
    %464 = vmatpush2.msra.mxu0 %v390
    %465 = vmatprep.subr.mxu0 0.0
    %466 = vmatpush2.msra.mxu0 %v389
    %467 = vmatprep.subr.mxu0 0.0
    %468 = vmatpush2.msra.mxu0 %v388
    %469 = vmatprep.subr.mxu0 0.0
    %470 = vmatpush2.msra.mxu0 %v387
    %471 = vmatprep.subr.mxu0 0.0
    %472 = vmatpush2.msra.mxu0 %v386
    %473 = vmatprep.subr.mxu0 0.0
    %474 = vmatpush2.msra.mxu0 %v385
    %475 = vmatprep.subr.mxu0 0.0
    %476 = vmatpush2.msra.mxu0 %v384
    %477 = vmatprep.mubr.f32.mxu0 %v410
    %478 = vmatmul.mubr.f32.gmra.mxu0 %v406
    %v479 = vpop.f32.mrf.mxu0
    %v480 = vadd.f32 0.0, %v479
    %v481 = vpop.f32.mrf.mxu0
    %482 = vdwg.mxu0
    %vm483 = vcmask 654336
    %v485 = vsel %vm483, %v401, 0
    %487 = vmatprep.subr.mxu0 0.0
    %488 = vmatpush1.msra.mxu0 0.0
    %489 = vmatprep.subr.mxu0 0.0
    %490 = vmatpush1.msra.mxu0 0.0
    %491 = vmatprep.subr.mxu0 0.0
    %492 = vmatpush1.msra.mxu0 0.0
    %493 = vmatprep.subr.mxu0 0.0
    %494 = vmatpush1.msra.mxu0 0.0
    %495 = vmatprep.subr.mxu0 0.0
    %496 = vmatpush1.msra.mxu0 0.0
    %497 = vmatprep.subr.mxu0 0.0
    %498 = vmatpush1.msra.mxu0 0.0
    %499 = vmatprep.subr.mxu0 0.0
    %500 = vmatpush1.msra.mxu0 %v335
    %501 = vmatprep.subr.mxu0 0.0
    %502 = vmatpush1.msra.mxu0 %v334
    %503 = vmatprep.subr.mxu0 0.0
    %504 = vmatpush1.msra.mxu0 %v333
    %505 = vmatprep.subr.mxu0 0.0
    %506 = vmatpush1.msra.mxu0 %v332
    %507 = vmatprep.subr.mxu0 0.0
    %508 = vmatpush1.msra.mxu0 %v331
    %509 = vmatprep.subr.mxu0 0.0
    %510 = vmatpush1.msra.mxu0 %v330
    %511 = vmatprep.subr.mxu0 0.0
    %512 = vmatpush1.msra.mxu0 %v329
    %513 = vmatprep.subr.mxu0 0.0
    %514 = vmatpush1.msra.mxu0 %v328
    %515 = vmatprep.subr.mxu0 0.0
    %516 = vmatpush1.msra.mxu0 %v327
    %517 = vmatprep.subr.mxu0 0.0
    %518 = vmatpush1.msra.mxu0 %v326
    %519 = vmatprep.subr.mxu0 0.0
    %520 = vmatpush2.msra.mxu0 0.0
    %521 = vmatprep.subr.mxu0 0.0
    %522 = vmatpush2.msra.mxu0 0.0
    %523 = vmatprep.subr.mxu0 0.0
    %524 = vmatpush2.msra.mxu0 0.0
    %525 = vmatprep.subr.mxu0 0.0
    %526 = vmatpush2.msra.mxu0 0.0
    %527 = vmatprep.subr.mxu0 0.0
    %528 = vmatpush2.msra.mxu0 0.0
    %529 = vmatprep.subr.mxu0 0.0
    %530 = vmatpush2.msra.mxu0 0.0
    %531 = vmatprep.subr.mxu0 0.0
    %532 = vmatpush2.msra.mxu0 0.0
    %533 = vmatprep.subr.mxu0 0.0
    %534 = vmatpush2.msra.mxu0 0.0
    %535 = vmatprep.subr.mxu0 0.0
    %536 = vmatpush2.msra.mxu0 0.0
    %537 = vmatprep.subr.mxu0 0.0
    %538 = vmatpush2.msra.mxu0 0.0
    %539 = vmatprep.subr.mxu0 0.0
    %540 = vmatpush2.msra.mxu0 0.0
    %541 = vmatprep.subr.mxu0 0.0
    %542 = vmatpush2.msra.mxu0 0.0
    %543 = vmatprep.subr.mxu0 0.0
    %544 = vmatpush2.msra.mxu0 0.0
    %545 = vmatprep.subr.mxu0 0.0
    %546 = vmatpush2.msra.mxu0 0.0
    %547 = vmatprep.subr.mxu0 0.0
    %548 = vmatpush2.msra.mxu0 0.0
    %549 = vmatprep.subr.mxu0 0.0
    %550 = vmatpush2.msra.mxu0 0.0
    %551 = vmatprep.mubr.f32.mxu0 0.0
    %552 = vmatmul.mubr.f32.gmra.mxu0 %v485
    %v553 = vpop.f32.mrf.mxu0
    %v554 = vadd.f32 %v480, %v553
    %v555 = vpop.f32.mrf.mxu0
    %556 = vdwg.mxu0
    %v557 = vadd.f32 %v554, %v400
    %v558 = vmax.f32 %v557, 0.0
    %v559 = vld [vmem:[%s5 + $0x6] sm:$0x3]
    %v560 = vld [vmem:[%s4] sm:$0xff]
    %v561 = vld [vmem:[%s4 + $0x8] sm:$0xff]
    %v562 = vld [vmem:[%s4 + $0x10] sm:$0xff]
    %v563 = vld [vmem:[%s4 + $0x18] sm:$0xff]
    %v564 = vunpack.c.l.bf16 %v560
    %v565 = vunpack.c.h.bf16 %v560
    %v566 = vunpack.c.l.bf16 %v561
    %v567 = vunpack.c.h.bf16 %v561
    %v568 = vunpack.c.l.bf16 %v562
    %v569 = vunpack.c.h.bf16 %v562
    %v570 = vunpack.c.l.bf16 %v563
    %v571 = vunpack.c.h.bf16 %v563
    %v573 = vlaneseq
    %v574 = vshrl.u32 %v573, 7
    %v575 = vsub.s32 0, %v574
    %v576 = vrot.slane %v559, %v575
    %v577 = vlaneseq
    %v578 = vshrl.u32 %v577, 7
    %v579 = vsub.s32 1, %v578
    %v580 = vrot.slane %v559, %v579
    %v584 = vsel %vm40, %v558, 0
    %586 = vmatprep.subr.mxu0 0.0
    %587 = vmatpush1.msra.mxu0 0.0
    %588 = vmatprep.subr.mxu0 0.0
    %589 = vmatpush1.msra.mxu0 0.0
    %590 = vmatprep.subr.mxu0 0.0
    %591 = vmatpush1.msra.mxu0 0.0
    %592 = vmatprep.subr.mxu0 0.0
    %593 = vmatpush1.msra.mxu0 0.0
    %594 = vmatprep.subr.mxu0 0.0
    %595 = vmatpush1.msra.mxu0 0.0
    %596 = vmatprep.subr.mxu0 0.0
    %597 = vmatpush1.msra.mxu0 0.0
    %598 = vmatprep.subr.mxu0 0.0
    %599 = vmatpush1.msra.mxu0 0.0
    %600 = vmatprep.subr.mxu0 0.0
    %601 = vmatpush1.msra.mxu0 0.0
    %602 = vmatprep.subr.mxu0 0.0
    %603 = vmatpush1.msra.mxu0 0.0
    %604 = vmatprep.subr.mxu0 0.0
    %605 = vmatpush1.msra.mxu0 0.0
    %606 = vmatprep.subr.mxu0 0.0
    %607 = vmatpush1.msra.mxu0 0.0
    %608 = vmatprep.subr.mxu0 0.0
    %609 = vmatpush1.msra.mxu0 0.0
    %610 = vmatprep.subr.mxu0 %v571
    %611 = vmatpush1.msra.mxu0 %v570
    %612 = vmatprep.subr.mxu0 %v569
    %613 = vmatpush1.msra.mxu0 %v568
    %614 = vmatprep.subr.mxu0 %v567
    %615 = vmatpush1.msra.mxu0 %v566
    %616 = vmatprep.subr.mxu0 %v565
    %617 = vmatpush1.msra.mxu0 %v564
    %618 = vmatprep.subr.mxu0 0.0
    %619 = vmatpush2.msra.mxu0 0.0
    %620 = vmatprep.subr.mxu0 0.0
    %621 = vmatpush2.msra.mxu0 0.0
    %622 = vmatprep.subr.mxu0 0.0
    %623 = vmatpush2.msra.mxu0 0.0
    %624 = vmatprep.subr.mxu0 0.0
    %625 = vmatpush2.msra.mxu0 0.0
    %626 = vmatprep.subr.mxu0 0.0
    %627 = vmatpush2.msra.mxu0 0.0
    %628 = vmatprep.subr.mxu0 0.0
    %629 = vmatpush2.msra.mxu0 0.0
    %630 = vmatprep.subr.mxu0 0.0
    %631 = vmatpush2.msra.mxu0 0.0
    %632 = vmatprep.subr.mxu0 0.0
    %633 = vmatpush2.msra.mxu0 0.0
    %634 = vmatprep.subr.mxu0 0.0
    %635 = vmatpush2.msra.mxu0 0.0
    %636 = vmatprep.subr.mxu0 0.0
    %637 = vmatpush2.msra.mxu0 0.0
    %638 = vmatprep.subr.mxu0 0.0
    %639 = vmatpush2.msra.mxu0 0.0
    %640 = vmatprep.subr.mxu0 0.0
    %641 = vmatpush2.msra.mxu0 0.0
    %642 = vmatprep.subr.mxu0 0.0
    %643 = vmatpush2.msra.mxu0 0.0
    %644 = vmatprep.subr.mxu0 0.0
    %645 = vmatpush2.msra.mxu0 0.0
    %646 = vmatprep.subr.mxu0 0.0
    %647 = vmatpush2.msra.mxu0 0.0
    %648 = vmatprep.subr.mxu0 0.0
    %649 = vmatpush2.msra.mxu0 0.0
    %650 = vmatprep.mubr.f32.mxu0 0.0
    %651 = vmatmul.mubr.f32.gmra.mxu0 %v584
    %v652 = vpop.f32.mrf.mxu0
    %v653 = vadd.f32 %v576, %v652
    %v654 = vpop.f32.mrf.mxu0
    %v655 = vadd.f32 %v580, %v654
    %656 = vdwg.mxu0
    %v657 = vmax.f32 %v653, 0.0
    %v658 = vmax.f32 %v655, 0.0
    %v661 = vcombine.low %v657, %v658
    %v663 = vunpack.c.l.s4 1966171168
    %v664 = vunpack.c.0.s8 %v663
    %v665 = vlaneseq
    %v666 = vshrl.u32 %v665, 7
    %v667 = vsub.s32 %v664, %v666
    %v668 = vrot.slane %v661, %v667
    %v670 = vunpack.c.l.s4 1966171168
    %v671 = vunpack.c.0.s8 %v670
    %v672 = vlaneseq
    %v673 = vshrl.u32 %v672, 7
    %v674 = vsub.s32 %v671, %v673
    %v675 = vrot.slane %v668, %v674
    %v677 = vadd.f32 %v315, %v675
    %v679 = vlaneseq
    %v680 = vshrl.u32 %v679, 7
    %v681 = vsub.s32 0, %v680
    %v682 = vrot.slane %v677, %v681
    %v683 = vlaneseq
    %v684 = vshrl.u32 %v683, 7
    %v685 = vsub.s32 1, %v684
    %v686 = vrot.slane %v677, %v685
    %v689 = vsel %vm265, %v682, 0.0
    %v690 = vsel %vm265, %v686, 0.0
    %v691 = vadd.f32 %v689, %v690
    %692 = vadd.xlane.f32.xlu0 %v691
    %v693 = vpop.xlane.xlu0 %692
    %v694 = vrot.slane %v693, 4
    %v695 = vadd.f32 %v693, %v694
    %v696 = vrot.slane %v695, 2
    %v697 = vadd.f32 %v695, %v696
    %v698 = vrot.slane %v697, 1
    %v699 = vadd.f32 %v697, %v698
    %s700 = vtos %v699
    %s701 = smul.f32 %s700, 0.00390625
    %v702 = vstv %s701
    %v703 = vsub.f32 %v677, %v702
    %v704 = vmul.f32 %v703, %v703
    %v706 = vlaneseq
    %v707 = vshrl.u32 %v706, 7
    %v708 = vsub.s32 0, %v707
    %v709 = vrot.slane %v704, %v708
    %v710 = vlaneseq
    %v711 = vshrl.u32 %v710, 7
    %v712 = vsub.s32 1, %v711
    %v713 = vrot.slane %v704, %v712
    %v716 = vsel %vm265, %v709, 0.0
    %v717 = vsel %vm265, %v713, 0.0
    %v718 = vadd.f32 %v716, %v717
    %719 = vadd.xlane.f32.xlu0 %v718
    %v720 = vpop.xlane.xlu0 %719
    %v721 = vrot.slane %v720, 4
    %v722 = vadd.f32 %v720, %v721
    %v723 = vrot.slane %v722, 2
    %v724 = vadd.f32 %v722, %v723
    %v725 = vrot.slane %v724, 1
    %v726 = vadd.f32 %v724, %v725
    %s727 = vtos %v726
    %s728 = smul.f32 %s727, 0.00390625
    %v729 = vld [vmem:[%s5 + $0x8] sm:$0x3]
    %v730 = vld [vmem:[%s5 + $0xa] sm:$0x3]
    %s731 = sadd.f32 %s728, 1e-05
    %v732 = vstv %s731
    %v733 = vrsqrt.pop %v732
    %s734 = vtos %v733
    %v735 = vstv %s734
    %v736 = vmul.f32 %v703, %v735
    %v737 = vmul.f32 %v736, %v729
    %v738 = vadd.f32 %v737, %v730
    %vm739 = vcmp.lt.s32.totalorder %v117, 256
    %vm740 = vmand %vm118, %vm739
    %741 = vst.msk [vmem:[#allocation4] sm:$0x3] %vm740, %v738
    // Predicated region
    $region26: #{tpu_custom_call.1} parent=1 // pred_check
      _
    $region27: #{tpu_custom_call.1} parent=1 // pred_check_branch
      %743 = sbr.rel (0) target = $region29
    $region28: #{tpu_custom_call.1} parent=1 // pred_region
      %s745 = ssub.s32 32, 32
      %746 = vsyncadd [#allocation5], %s745
      %s748 = sshll.u32 [#allocation4], 4
      %s749 = int_to_ptr.vmem [resolvable:$true] %s748
      %751 = dma.vmem_to_hbm [thread:$0]  %s749, 32, %s6, [#allocation5]
    $region29: #{tpu_custom_call.1} parent=1 // pred_fallthru
      _
    // Predicated region
    $region30: #{tpu_custom_call.1} parent=1 // pred_check
      _
    $region31: #{tpu_custom_call.1} parent=1 // pred_check_branch
      %753 = sbr.rel (0) target = $region33
    $region32: #{tpu_custom_call.1} parent=1 // pred_region
      %754 = dma.done [#allocation5], 32
    $region33: #{tpu_custom_call.1} parent=1 // pred_fallthru
      _
    %755 = vsyncpa [#allocation5], 1

</llo_original>
